<compile_context>
chip_gen: v6e
topology: v6e:2x2x1
jax: 0.10.0
libtpu: 0.0.40
codegen_flags: <defaults>
</compile_context>

<pallas_src>
import functools
import math

import jax
import jax.numpy as jnp
from jax.experimental import pallas as pl
from jax.experimental.pallas import tpu as pltpu


def _layernorm_kernel(x_ref, g_ref, b_ref, o_ref, *, eps, n_features):
    """One batch tile: normalize each row over its F features, apply affine."""
    x = x_ref[...].astype(jnp.float32)                   # (TB, F)
    mean = jnp.mean(x, axis=1, keepdims=True)            # (TB, 1)
    diff = x - mean
    # torch.Tensor.std() uses the unbiased (N-1) estimator.
    var = jnp.sum(diff * diff, axis=1, keepdims=True) / float(n_features - 1)
    std = jnp.sqrt(var)
    inv = 1.0 / (std + eps)                              # one divide per row
    y = diff * inv
    y = y * g_ref[...] + b_ref[...]                      # (1, F) broadcast
    o_ref[...] = y.astype(o_ref.dtype)


def _choose_batch_tile(B, F, *, itemsize=4, max_rows=None, vmem_budget=24 << 20):
    """Pick (rows per grid step, padded batch size).

    Prefer the whole batch if it fits the VMEM budget; else the largest
    multiple-of-8 divisor of B that fits (sublane rule: the block's row dim
    must be a multiple of 8 or equal the full batch); else pad B so a fitting
    multiple-of-8 tile divides it.
    """
    def fits(tb):
        # x tile + out tile double-buffered, plus gamma/beta (1, F) buffers.
        return itemsize * (4 * tb * F + 4 * F) <= vmem_budget

    cap = B if max_rows is None else min(B, max_rows)
    if cap == B and fits(B):
        return B, B
    # Largest multiple-of-8 divisor of B that fits -> no padding needed.
    tb = (cap // 8) * 8
    while tb >= 8:
        if B % tb == 0 and fits(tb):
            return tb, B
        tb -= 8
    if B <= 8:
        return B, B              # tiny batch: whole batch per step
    # No divisor fits: pad the batch so a fitting multiple-of-8 tile divides it.
    tb = max((cap // 8) * 8, 8)
    while tb > 8 and not fits(tb):
        tb -= 8
    b_pad = ((B + tb - 1) // tb) * tb
    return tb, b_pad


def layer_norm_forward(x, gamma=None, beta=None, *, eps=1e-5,
                       max_rows_per_block=None):
    """Pallas TPU LayerNorm (usi3d_gan variant).

    x: (B, C, *spatial) float array.
    gamma/beta: (C,) arrays, or None for affine=False.
    """
    orig_shape = x.shape
    B, C = x.shape[0], x.shape[1]
    spatial = int(math.prod(x.shape[2:])) if x.ndim > 2 else 1
    F = C * spatial

    if gamma is None:
        gamma = jnp.ones((C,), jnp.float32)
    if beta is None:
        beta = jnp.zeros((C,), jnp.float32)

    # Lane-dense (B, F) view; expand per-channel affine params once, outside
    # the kernel, so the in-kernel affine is a plain (1, F) broadcast.
    x2 = x.reshape(B, F)
    g_full = jnp.repeat(gamma.astype(jnp.float32), spatial).reshape(1, F)
    b_full = jnp.repeat(beta.astype(jnp.float32), spatial).reshape(1, F)

    TB, B_pad = _choose_batch_tile(B, F, max_rows=max_rows_per_block)
    if B_pad != B:
        x2 = jnp.pad(x2, ((0, B_pad - B), (0, 0)))
    grid = (pl.cdiv(B_pad, TB),)

    # Explicit VMEM limit with headroom, re-derived from the block size
    # (keeps depth-2 pipelining and stays under v7x's 64 MiB physical VMEM).
    need = 4 * (4 * TB * F + 4 * F)
    vmem_limit = min(max(int(1.5 * need) + (2 << 20), 8 << 20), 48 << 20)

    kernel = functools.partial(_layernorm_kernel, eps=float(eps), n_features=F)
    out = pl.pallas_call(
        kernel,
        out_shape=jax.ShapeDtypeStruct((B_pad, F), x.dtype),
        grid=grid,
        in_specs=[
            pl.BlockSpec((TB, F), lambda i: (i, 0)),   # x rows, tiled over batch
            pl.BlockSpec((1, F), lambda i: (0, 0)),    # gamma (resident, fetched once)
            pl.BlockSpec((1, F), lambda i: (0, 0)),    # beta  (resident, fetched once)
        ],
        out_specs=pl.BlockSpec((TB, F), lambda i: (i, 0)),
        compiler_params=pltpu.CompilerParams(
            dimension_semantics=("parallel",),         # batch tiles independent
            vmem_limit_bytes=vmem_limit,
        ),
    )(x2, g_full, b_full)

    if B_pad != B:
        out = out[:B]
    return out.reshape(orig_shape)


def _reference_layernorm(x, gamma, beta, eps=1e-5):
    """Pure-JAX mirror of the PyTorch module (both branches coincide)."""
    B = x.shape[0]
    rshape = (B,) + (1,) * (x.ndim - 1)
    flat = x.reshape(B, -1)
    mean = flat.mean(axis=1).reshape(rshape)
    std = flat.std(axis=1, ddof=1).reshape(rshape)
    y = (x - mean) / (std + eps)
    pshape = (1, -1) + (1,) * (x.ndim - 2)
    return y * gamma.reshape(pshape) + beta.reshape(pshape)


if __name__ == "__main__":
    key = jax.random.PRNGKey(0)
    eps = 1e-5

    # Case 1: small NCHW input (B=2, C=4, H=W=16) -> F = 1024 (lane-dense).
    B, C, H, W = 2, 4, 16, 16
    key, kx, kg = jax.random.split(key, 3)
    x = jax.random.normal(kx, (B, C, H, W), jnp.float32)
    gamma = jax.random.uniform(kg, (C,), jnp.float32)   # torch .uniform_() init
    beta = jnp.zeros((C,), jnp.float32)

    y = jax.block_until_ready(layer_norm_forward(x, gamma, beta, eps=eps))
    ref = _reference_layernorm(x, gamma, beta, eps)
    assert y.shape == x.shape
    assert jnp.allclose(y, ref, atol=1e-5, rtol=1e-5)

    # Case 2: larger batch to exercise the batch-tiled grid (TB=8, grid=(2,)).
    B2 = 16
    key, kx2 = jax.random.split(key)
    x2 = jax.random.normal(kx2, (B2, C, H, W), jnp.float32)
    y2 = jax.block_until_ready(
        layer_norm_forward(x2, gamma, beta, eps=eps, max_rows_per_block=8))
    ref2 = _reference_layernorm(x2, gamma, beta, eps)
    assert y2.shape == x2.shape
    assert jnp.allclose(y2, ref2, atol=1e-5, rtol=1e-5)

    # Case 3: B == 1 branch of the PyTorch module (reduces over the same
    # elements, so the same kernel path covers it).
    key, kx3 = jax.random.split(key)
    x3 = jax.random.normal(kx3, (1, C, H, W), jnp.float32)
    y3 = jax.block_until_ready(layer_norm_forward(x3, gamma, beta, eps=eps))
    ref3 = _reference_layernorm(x3, gamma, beta, eps)
    assert y3.shape == x3.shape
    assert jnp.allclose(y3, ref3, atol=1e-5, rtol=1e-5)

    print("KERNEL_OK")
</pallas_src>

<mosaic_0001>
module attributes {stable_mosaic.version = 11 : i64} {
  func.func @_layernorm_kernel(%arg0: i32, %arg1: memref<2x1024xf32, #tpu.memory_space<vmem>>, %arg2: memref<1x1024xf32, #tpu.memory_space<vmem>>, %arg3: memref<1x1024xf32, #tpu.memory_space<vmem>>, %arg4: memref<2x1024xf32, #tpu.memory_space<vmem>>) attributes {dimension_semantics = [#tpu.dimension_semantics<parallel>], iteration_bounds = array<i64: 1>, scalar_prefetch = 0 : i64, scratch_operands = 0 : i64, tpu.core_type = #tpu.core_type<tc>, window_params = [{transform_indices = @transform_0, window_bounds = array<i64: 2, 1024>}, {pipeline_mode = #tpu.pipeline_mode<synchronous>, transform_indices = @transform_1, window_bounds = array<i64: 1, 1024>}, {pipeline_mode = #tpu.pipeline_mode<synchronous>, transform_indices = @transform_2, window_bounds = array<i64: 1, 1024>}, {transform_indices = @transform_3, window_bounds = array<i64: 2, 1024>}]} {
    %c0 = arith.constant 0 : index
    %c0_0 = arith.constant 0 : index
    %0 = vector.load %arg1[%c0, %c0_0] : memref<2x1024xf32, #tpu.memory_space<vmem>>, vector<2x1024xf32>
    %cst = arith.constant dense<0.000000e+00> : vector<2xf32>
    %1 = vector.multi_reduction <add>, %0, %cst [1] : vector<2x1024xf32> to vector<2xf32>
    %2 = vector.shape_cast %1 : vector<2xf32> to vector<2x1xf32>
    %cst_1 = arith.constant 1.024000e+03 : f32
    %3 = vector.broadcast %cst_1 : f32 to vector<2x1xf32>
    %4 = arith.divf %2, %3 : vector<2x1xf32>
    %5 = vector.broadcast %4 : vector<2x1xf32> to vector<2x1024xf32>
    %6 = arith.subf %0, %5 : vector<2x1024xf32>
    %7 = arith.mulf %6, %6 : vector<2x1024xf32>
    %cst_2 = arith.constant dense<0.000000e+00> : vector<2xf32>
    %8 = vector.multi_reduction <add>, %7, %cst_2 [1] : vector<2x1024xf32> to vector<2xf32>
    %9 = vector.shape_cast %8 : vector<2xf32> to vector<2x1xf32>
    %cst_3 = arith.constant 1.023000e+03 : f32
    %10 = vector.broadcast %cst_3 : f32 to vector<2x1xf32>
    %11 = arith.divf %9, %10 : vector<2x1xf32>
    %12 = math.sqrt %11 : vector<2x1xf32>
    %cst_4 = arith.constant 9.99999974E-6 : f32
    %13 = vector.broadcast %cst_4 : f32 to vector<2x1xf32>
    %14 = arith.addf %12, %13 : vector<2x1xf32>
    %cst_5 = arith.constant 1.000000e+00 : f32
    %15 = vector.broadcast %cst_5 : f32 to vector<2x1xf32>
    %16 = arith.divf %15, %14 : vector<2x1xf32>
    %17 = vector.broadcast %16 : vector<2x1xf32> to vector<2x1024xf32>
    %18 = arith.mulf %6, %17 : vector<2x1024xf32>
    %c0_6 = arith.constant 0 : index
    %c0_7 = arith.constant 0 : index
    %19 = vector.load %arg2[%c0_6, %c0_7] : memref<1x1024xf32, #tpu.memory_space<vmem>>, vector<1x1024xf32>
    %20 = vector.broadcast %19 : vector<1x1024xf32> to vector<2x1024xf32>
    %21 = arith.mulf %18, %20 : vector<2x1024xf32>
    %c0_8 = arith.constant 0 : index
    %c0_9 = arith.constant 0 : index
    %22 = vector.load %arg3[%c0_8, %c0_9] : memref<1x1024xf32, #tpu.memory_space<vmem>>, vector<1x1024xf32>
    %23 = vector.broadcast %22 : vector<1x1024xf32> to vector<2x1024xf32>
    %24 = arith.addf %21, %23 : vector<2x1024xf32>
    %c0_10 = arith.constant 0 : index
    %c0_11 = arith.constant 0 : index
    %25 = vector.load %arg4[%c0_10, %c0_11] : memref<2x1024xf32, #tpu.memory_space<vmem>>, vector<2x1024xf32>
    tpu.vector_store %arg4[%c0_10, %c0_11], %24 {strides = array<i32>} : memref<2x1024xf32, #tpu.memory_space<vmem>>, vector<2x1024xf32>,
    return
  }
  func.func @transform_0(%arg0: i32) -> (i32, i32) {
    %c0_i32 = arith.constant 0 : i32
    %c0_i32_0 = arith.constant 0 : i32
    return %arg0, %c0_i32 : i32, i32
  }
  func.func @transform_1(%arg0: i32) -> (i32, i32) {
    %c0_i32 = arith.constant 0 : i32
    %c0_i32_0 = arith.constant 0 : i32
    %c0_i32_1 = arith.constant 0 : i32
    return %c0_i32, %c0_i32_0 : i32, i32
  }
  func.func @transform_2(%arg0: i32) -> (i32, i32) {
    %c0_i32 = arith.constant 0 : i32
    %c0_i32_0 = arith.constant 0 : i32
    %c0_i32_1 = arith.constant 0 : i32
    return %c0_i32, %c0_i32_0 : i32, i32
  }
  func.func @transform_3(%arg0: i32) -> (i32, i32) {
    %c0_i32 = arith.constant 0 : i32
    %c0_i32_0 = arith.constant 0 : i32
    return %arg0, %c0_i32 : i32, i32
  }
}

</mosaic_0001>

<llo_original>
// kernel: tpu_custom_call.1
$region0: #{tpu_custom_call.1}
  #allocation0 [shape = 'u32[]', space=smem, size = 0x4, offset = 0x4, fixed_abs, tag = 'smem constant byte address 0x4 - core index']
  #allocation1 [shape = 'u32[144,128]{1,0:T(1,128)}', space=vmem, size = 0x12000, scoped, tag = 'internal scratch']
  %s0 = inlined_call_operand.hbm [shape: f32[2,1024], index: 0, kind: input, shape index: {}]
  %s1 = inlined_call_operand.hbm [shape: f32[1,1024], index: 1, kind: input, shape index: {}]
  %s2 = inlined_call_operand.hbm [shape: f32[1,1024], index: 2, kind: input, shape index: {}]
  %s3 = inlined_call_operand.hbm [shape: f32[2,1024], index: 3, kind: output, shape index: {}]
  %s4 = sld [smem:[#allocation0]]
  $region34: #{tpu_custom_call.1} parent=0
    _
  %s6 = ssub.s32 1, %s4
  %s7 = scalar_select 0, %s6, %s4
  $region1: #{tpu_custom_call.1} parent=0
    #allocation2 [shape = 'u8[8192]{0}', space=vmem, size = 0x2000, scoped, tag = 'input window, operand 0, single buffered']
    #allocation3 [shape = 's32[1]{0}', space=sflag, size = 0x4, scoped, tag = 'scoped memory for tpu_custom_call.1']
    #allocation4 [shape = 's32[1]{0}', space=sflag, size = 0x4, scoped, tag = 'scoped memory for tpu_custom_call.1']
    #allocation5 [shape = 'u8[4096]{0}', space=vmem, size = 0x1000, scoped, tag = 'input window, operand 1, single buffered']
    #allocation6 [shape = 's32[1]{0}', space=sflag, size = 0x4, scoped, tag = 'scoped memory for tpu_custom_call.1']
    #allocation7 [shape = 'u8[4096]{0}', space=vmem, size = 0x1000, scoped, tag = 'input window, operand 2, single buffered']
    #allocation8 [shape = 'u8[8192]{0}', space=vmem, size = 0x2000, scoped, tag = 'output window, operand 0, single buffered']
    %8 = vsyncpa [#allocation3], 0
    %9 = vsyncpa [#allocation6], 0
    %10 = vsyncpa [#allocation4], 0
    // Predicated region
    $region2: #{tpu_custom_call.1} parent=1 // pred_check
      _
    $region3: #{tpu_custom_call.1} parent=1 // pred_check_branch
      %12 = sbr.rel (0) target = $region5
    $region4: #{tpu_custom_call.1} parent=1 // pred_region
      %s14 = ssub.s32 256, 256
      %15 = vsyncadd [#allocation3], %s14
      %s17 = sshll.u32 [#allocation2], 4
      %s18 = int_to_ptr.vmem [resolvable:$true] %s17
      %20 = dma.hbm_to_vmem [thread:$0]  %s0, 256, %s18, [#allocation3]
    $region5: #{tpu_custom_call.1} parent=1 // pred_fallthru
      _
    // Predicated region
    $region6: #{tpu_custom_call.1} parent=1 // pred_check
      _
    $region7: #{tpu_custom_call.1} parent=1 // pred_check_branch
      %22 = sbr.rel (0) target = $region9
    $region8: #{tpu_custom_call.1} parent=1 // pred_region
      %s24 = ssub.s32 128, 128
      %25 = vsyncadd [#allocation6], %s24
      %s27 = sshll.u32 [#allocation5], 4
      %s28 = int_to_ptr.vmem [resolvable:$true] %s27
      %30 = dma.hbm_to_vmem [thread:$0]  %s1, 128, %s28, [#allocation6]
    $region9: #{tpu_custom_call.1} parent=1 // pred_fallthru
      _
    // Predicated region
    $region10: #{tpu_custom_call.1} parent=1 // pred_check
      _
    $region11: #{tpu_custom_call.1} parent=1 // pred_check_branch
      %32 = sbr.rel (0) target = $region13
    $region12: #{tpu_custom_call.1} parent=1 // pred_region
      %s34 = ssub.s32 128, 128
      %35 = vsyncadd [#allocation6], %s34
      %s37 = sshll.u32 [#allocation7], 4
      %s38 = int_to_ptr.vmem [resolvable:$true] %s37
      %40 = dma.hbm_to_vmem [thread:$0]  %s2, 128, %s38, [#allocation6]
    $region13: #{tpu_custom_call.1} parent=1 // pred_fallthru
      _
    // Predicated region
    $region14: #{tpu_custom_call.1} parent=1 // pred_check
      _
    $region15: #{tpu_custom_call.1} parent=1 // pred_check_branch
      %42 = sbr.rel (0) target = $region17
    $region16: #{tpu_custom_call.1} parent=1 // pred_region
      %43 = dma.done [#allocation3], 256
    $region17: #{tpu_custom_call.1} parent=1 // pred_fallthru
      _
    // Predicated region
    $region18: #{tpu_custom_call.1} parent=1 // pred_check
      _
    $region19: #{tpu_custom_call.1} parent=1 // pred_check_branch
      %45 = sbr.rel (0) target = $region21
    $region20: #{tpu_custom_call.1} parent=1 // pred_region
      %46 = dma.done [#allocation6], 128
    $region21: #{tpu_custom_call.1} parent=1 // pred_fallthru
      _
    // Predicated region
    $region22: #{tpu_custom_call.1} parent=1 // pred_check
      _
    $region23: #{tpu_custom_call.1} parent=1 // pred_check_branch
      %48 = sbr.rel (0) target = $region25
    $region24: #{tpu_custom_call.1} parent=1 // pred_region
      %49 = dma.done [#allocation6], 128
    $region25: #{tpu_custom_call.1} parent=1 // pred_fallthru
      _
    %v50 = vld [vmem:[#allocation2] sm:$0xff]
    %v51 = vld [vmem:[#allocation2 + $0x8] sm:$0xff]
    %v54 = vcombine.high %v50, %v50
    %v56 = vunpack.c.l.s4 1983009808
    %v57 = vunpack.c.0.s8 %v56
    %v58 = vlaneseq
    %v59 = vshrl.u32 %v58, 7
    %v60 = vsub.s32 %v57, %v59
    %v61 = vrot.slane %v50, %v60
    %v63 = vunpack.c.l.s4 1983009808
    %v64 = vunpack.c.0.s8 %v63
    %v65 = vlaneseq
    %v66 = vshrl.u32 %v65, 7
    %v67 = vsub.s32 %v64, %v66
    %v68 = vrot.slane %v54, %v67
    %v69 = vcombine.high %v61, %v61
    %v70 = vcombine.high %v68, %v68
    %v71 = vcombine.high %v51, %v51
    %v73 = vunpack.c.l.s4 1983009808
    %v74 = vunpack.c.0.s8 %v73
    %v75 = vlaneseq
    %v76 = vshrl.u32 %v75, 7
    %v77 = vsub.s32 %v74, %v76
    %v78 = vrot.slane %v51, %v77
    %v80 = vunpack.c.l.s4 1983009808
    %v81 = vunpack.c.0.s8 %v80
    %v82 = vlaneseq
    %v83 = vshrl.u32 %v82, 7
    %v84 = vsub.s32 %v81, %v83
    %v85 = vrot.slane %v71, %v84
    %v86 = vcombine.high %v78, %v78
    %v87 = vcombine.high %v85, %v85
    %vm96 = vcmask 1041408
    %v97 = vsel %vm96, %v61, 0.0
    %v98 = vsel %vm96, %v69, 0.0
    %v99 = vadd.f32 %v97, %v98
    %v100 = vsel %vm96, %v68, 0.0
    %v101 = vadd.f32 %v99, %v100
    %v102 = vsel %vm96, %v70, 0.0
    %v103 = vadd.f32 %v101, %v102
    %v104 = vsel %vm96, %v78, 0.0
    %v105 = vadd.f32 %v103, %v104
    %v106 = vsel %vm96, %v86, 0.0
    %v107 = vadd.f32 %v105, %v106
    %v108 = vsel %vm96, %v85, 0.0
    %v109 = vadd.f32 %v107, %v108
    %v110 = vsel %vm96, %v87, 0.0
    %v111 = vadd.f32 %v109, %v110
    %112 = vadd.xlane.f32.xlu0 %v111
    %v113 = vpop.xlane.xlu0 %112
    %v114 = vrcp.pop 1024.0
    %v115 = vmul.f32 %v113, %v114
    %v118 = vunpack.c.l.s4 269488144
    %v119 = vunpack.c.0.s8 %v118
    %v120 = vlaneseq
    %v121 = vshrl.u32 %v120, 7
    %v122 = vsub.s32 %v119, %v121
    %v123 = vrot.slane %v115, %v122
    %v125 = vsub.f32 %v50, %v123
    %v126 = vsub.f32 %v51, %v123
    %v127 = vmul.f32 %v125, %v125
    %v128 = vmul.f32 %v126, %v126
    %v131 = vcombine.high %v127, %v127
    %v133 = vunpack.c.l.s4 1983009808
    %v134 = vunpack.c.0.s8 %v133
    %v135 = vlaneseq
    %v136 = vshrl.u32 %v135, 7
    %v137 = vsub.s32 %v134, %v136
    %v138 = vrot.slane %v127, %v137
    %v140 = vunpack.c.l.s4 1983009808
    %v141 = vunpack.c.0.s8 %v140
    %v142 = vlaneseq
    %v143 = vshrl.u32 %v142, 7
    %v144 = vsub.s32 %v141, %v143
    %v145 = vrot.slane %v131, %v144
    %v146 = vcombine.high %v138, %v138
    %v147 = vcombine.high %v145, %v145
    %v148 = vcombine.high %v128, %v128
    %v150 = vunpack.c.l.s4 1983009808
    %v151 = vunpack.c.0.s8 %v150
    %v152 = vlaneseq
    %v153 = vshrl.u32 %v152, 7
    %v154 = vsub.s32 %v151, %v153
    %v155 = vrot.slane %v128, %v154
    %v157 = vunpack.c.l.s4 1983009808
    %v158 = vunpack.c.0.s8 %v157
    %v159 = vlaneseq
    %v160 = vshrl.u32 %v159, 7
    %v161 = vsub.s32 %v158, %v160
    %v162 = vrot.slane %v148, %v161
    %v163 = vcombine.high %v155, %v155
    %v164 = vcombine.high %v162, %v162
    %v173 = vsel %vm96, %v138, 0.0
    %v174 = vsel %vm96, %v146, 0.0
    %v175 = vadd.f32 %v173, %v174
    %v176 = vsel %vm96, %v145, 0.0
    %v177 = vadd.f32 %v175, %v176
    %v178 = vsel %vm96, %v147, 0.0
    %v179 = vadd.f32 %v177, %v178
    %v180 = vsel %vm96, %v155, 0.0
    %v181 = vadd.f32 %v179, %v180
    %v182 = vsel %vm96, %v163, 0.0
    %v183 = vadd.f32 %v181, %v182
    %v184 = vsel %vm96, %v162, 0.0
    %v185 = vadd.f32 %v183, %v184
    %v186 = vsel %vm96, %v164, 0.0
    %v187 = vadd.f32 %v185, %v186
    %188 = vadd.xlane.f32.xlu0 %v187
    %v189 = vpop.xlane.xlu0 %188
    %v190 = vrcp.pop 1023.0
    %v191 = vmul.f32 %v189, %v190
    %v192 = vrsqrt.pop %v191
    %v193 = vmul.f32 %v191, %v192
    %vm194 = vcmp.eq.f32.partialorder %v191, inf
    %v195 = vsel %vm194, %v191, %v193
    %vm196 = vcmp.eq.f32.partialorder %v191, 0.0
    %v197 = vand.u32 %v191, 2147483648
    %v198 = vsel %vm196, %v197, %v195
    %v199 = vadd.f32 %v198, 1e-05
    %v200 = vrcp.pop %v199
    %v201 = vmul.f32 1.0, %v200
    %v204 = vunpack.c.l.s4 269488144
    %v205 = vunpack.c.0.s8 %v204
    %v206 = vlaneseq
    %v207 = vshrl.u32 %v206, 7
    %v208 = vsub.s32 %v205, %v207
    %v209 = vrot.slane %v201, %v208
    %v211 = vmul.f32 %v125, %v209
    %v212 = vmul.f32 %v126, %v209
    %v213 = vld [vmem:[#allocation5] sm:$0xff]
    %v215 = vlaneseq
    %v216 = vshrl.u32 %v215, 7
    %v217 = vsub.s32 0, %v216
    %v218 = vrot.slane %v213, %v217
    %v219 = vlaneseq
    %v220 = vshrl.u32 %v219, 7
    %v221 = vsub.s32 1, %v220
    %v222 = vrot.slane %v213, %v221
    %v223 = vlaneseq
    %v224 = vshrl.u32 %v223, 7
    %v225 = vsub.s32 2, %v224
    %v226 = vrot.slane %v213, %v225
    %v227 = vlaneseq
    %v228 = vshrl.u32 %v227, 7
    %v229 = vsub.s32 3, %v228
    %v230 = vrot.slane %v213, %v229
    %v231 = vlaneseq
    %v232 = vshrl.u32 %v231, 7
    %v233 = vsub.s32 4, %v232
    %v234 = vrot.slane %v213, %v233
    %v235 = vlaneseq
    %v236 = vshrl.u32 %v235, 7
    %v237 = vsub.s32 5, %v236
    %v238 = vrot.slane %v213, %v237
    %v239 = vlaneseq
    %v240 = vshrl.u32 %v239, 7
    %v241 = vsub.s32 6, %v240
    %v242 = vrot.slane %v213, %v241
    %v243 = vlaneseq
    %v244 = vshrl.u32 %v243, 7
    %v245 = vsub.s32 7, %v244
    %v246 = vrot.slane %v213, %v245
    %v247 = vcombine.low %v218, %v222
    %v248 = vcombine.low %v226, %v230
    %v250 = vunpack.c.l.s4 1983009808
    %v251 = vunpack.c.0.s8 %v250
    %v252 = vlaneseq
    %v253 = vshrl.u32 %v252, 7
    %v254 = vsub.s32 %v251, %v253
    %v255 = vrot.slane %v247, %v254
    %v257 = vunpack.c.l.s4 1983009808
    %v258 = vunpack.c.0.s8 %v257
    %v259 = vlaneseq
    %v260 = vshrl.u32 %v259, 7
    %v261 = vsub.s32 %v258, %v260
    %v262 = vrot.slane %v248, %v261
    %v263 = vcombine.low %v255, %v262
    %v264 = vcombine.low %v234, %v238
    %v265 = vcombine.low %v242, %v246
    %v267 = vunpack.c.l.s4 1983009808
    %v268 = vunpack.c.0.s8 %v267
    %v269 = vlaneseq
    %v270 = vshrl.u32 %v269, 7
    %v271 = vsub.s32 %v268, %v270
    %v272 = vrot.slane %v264, %v271
    %v274 = vunpack.c.l.s4 1983009808
    %v275 = vunpack.c.0.s8 %v274
    %v276 = vlaneseq
    %v277 = vshrl.u32 %v276, 7
    %v278 = vsub.s32 %v275, %v277
    %v279 = vrot.slane %v265, %v278
    %v280 = vcombine.low %v272, %v279
    %v283 = vmul.f32 %v211, %v263
    %v284 = vmul.f32 %v212, %v280
    %v285 = vld [vmem:[#allocation7] sm:$0xff]
    %v287 = vlaneseq
    %v288 = vshrl.u32 %v287, 7
    %v289 = vsub.s32 0, %v288
    %v290 = vrot.slane %v285, %v289
    %v291 = vlaneseq
    %v292 = vshrl.u32 %v291, 7
    %v293 = vsub.s32 1, %v292
    %v294 = vrot.slane %v285, %v293
    %v295 = vlaneseq
    %v296 = vshrl.u32 %v295, 7
    %v297 = vsub.s32 2, %v296
    %v298 = vrot.slane %v285, %v297
    %v299 = vlaneseq
    %v300 = vshrl.u32 %v299, 7
    %v301 = vsub.s32 3, %v300
    %v302 = vrot.slane %v285, %v301
    %v303 = vlaneseq
    %v304 = vshrl.u32 %v303, 7
    %v305 = vsub.s32 4, %v304
    %v306 = vrot.slane %v285, %v305
    %v307 = vlaneseq
    %v308 = vshrl.u32 %v307, 7
    %v309 = vsub.s32 5, %v308
    %v310 = vrot.slane %v285, %v309
    %v311 = vlaneseq
    %v312 = vshrl.u32 %v311, 7
    %v313 = vsub.s32 6, %v312
    %v314 = vrot.slane %v285, %v313
    %v315 = vlaneseq
    %v316 = vshrl.u32 %v315, 7
    %v317 = vsub.s32 7, %v316
    %v318 = vrot.slane %v285, %v317
    %v319 = vcombine.low %v290, %v294
    %v320 = vcombine.low %v298, %v302
    %v322 = vunpack.c.l.s4 1983009808
    %v323 = vunpack.c.0.s8 %v322
    %v324 = vlaneseq
    %v325 = vshrl.u32 %v324, 7
    %v326 = vsub.s32 %v323, %v325
    %v327 = vrot.slane %v319, %v326
    %v329 = vunpack.c.l.s4 1983009808
    %v330 = vunpack.c.0.s8 %v329
    %v331 = vlaneseq
    %v332 = vshrl.u32 %v331, 7
    %v333 = vsub.s32 %v330, %v332
    %v334 = vrot.slane %v320, %v333
    %v335 = vcombine.low %v327, %v334
    %v336 = vcombine.low %v306, %v310
    %v337 = vcombine.low %v314, %v318
    %v339 = vunpack.c.l.s4 1983009808
    %v340 = vunpack.c.0.s8 %v339
    %v341 = vlaneseq
    %v342 = vshrl.u32 %v341, 7
    %v343 = vsub.s32 %v340, %v342
    %v344 = vrot.slane %v336, %v343
    %v346 = vunpack.c.l.s4 1983009808
    %v347 = vunpack.c.0.s8 %v346
    %v348 = vlaneseq
    %v349 = vshrl.u32 %v348, 7
    %v350 = vsub.s32 %v347, %v349
    %v351 = vrot.slane %v337, %v350
    %v352 = vcombine.low %v344, %v351
    %v355 = vadd.f32 %v283, %v335
    %v356 = vadd.f32 %v284, %v352
    %357 = vst [vmem:[#allocation8] sm:$0xff] %v355
    %358 = vst [vmem:[#allocation8 + $0x8] sm:$0xff] %v356
    // Predicated region
    $region26: #{tpu_custom_call.1} parent=1 // pred_check
      _
    $region27: #{tpu_custom_call.1} parent=1 // pred_check_branch
      %360 = sbr.rel (0) target = $region29
    $region28: #{tpu_custom_call.1} parent=1 // pred_region
      %s362 = ssub.s32 256, 256
      %363 = vsyncadd [#allocation4], %s362
      %s365 = sshll.u32 [#allocation8], 4
      %s366 = int_to_ptr.vmem [resolvable:$true] %s365
      %368 = dma.vmem_to_hbm [thread:$0]  %s366, 256, %s3, [#allocation4]
    $region29: #{tpu_custom_call.1} parent=1 // pred_fallthru
      _
    // Predicated region
    $region30: #{tpu_custom_call.1} parent=1 // pred_check
      _
    $region31: #{tpu_custom_call.1} parent=1 // pred_check_branch
      %370 = sbr.rel (0) target = $region33
    $region32: #{tpu_custom_call.1} parent=1 // pred_region
      %371 = dma.done [#allocation4], 256
    $region33: #{tpu_custom_call.1} parent=1 // pred_fallthru
      _
    %372 = vsyncpa [#allocation3], 1
    %373 = vsyncpa [#allocation6], 1
    %374 = vsyncpa [#allocation4], 1

</llo_original>
